<compile_context>
chip_gen: v5e
topology: v5e:2x2
jax: 0.10.0
libtpu: 0.0.40
codegen_flags: <defaults>
</compile_context>

<pallas_src>
import functools
import math

import jax
import jax.numpy as jnp
from jax import lax
from jax.experimental import pallas as pl
from jax.experimental.pallas import tpu as pltpu

LN_EPS = 1e-5                      # torch.nn.LayerNorm default
MXU_DTYPE = jnp.bfloat16           # MXU operand dtype (f32 accumulation)


def _tile(dim, target, align):
    """Largest `align`-multiple divisor of `dim` that is <= target, else full dim."""
    if dim <= target:
        return dim
    t = (target // align) * align
    while t >= align:
        if dim % t == 0:
            return t
        t -= align
    return dim


_CFG = None


def _cfg():
    """Per-generation tiling targets / VMEM budget (v7x: 64 MiB per TC)."""
    global _CFG
    if _CFG is None:
        vmem_cap = 0
        try:
            vmem_cap = int(pltpu.get_tpu_info().vmem_capacity_bytes)
        except Exception:
            vmem_cap = 0
        if vmem_cap >= 100 * 1024 * 1024:
            # v5e / v6e: 128 MiB VMEM -> bigger tiles amortize per-step overhead.
            _CFG = dict(vmem_limit=96 * 1024 * 1024, tm=512, tq=512, tk=1024, tc=1024)
        else:
            # v7x (64 MiB) or unknown: conservative tiling, tight VMEM limit.
            _CFG = dict(vmem_limit=48 * 1024 * 1024, tm=256, tq=256, tk=512, tc=512)
    return _CFG


def _cparams(*sem):
    return pltpu.CompilerParams(dimension_semantics=sem,
                                vmem_limit_bytes=_cfg()["vmem_limit"])


# --------------------------- in-kernel helpers ------------------------------ #

def _layernorm(x, g, b):
    x = x.astype(jnp.float32)
    mu = jnp.mean(x, axis=-1, keepdims=True)
    var = jnp.mean(jnp.square(x - mu), axis=-1, keepdims=True)
    return (x - mu) * lax.rsqrt(var + LN_EPS) * g + b


def _erf_poly(x):
    # Abramowitz & Stegun 7.1.26 rational approximation of erf (|err| < 1.5e-7),
    # i.e. exact-GELU within float32 precision (avoids lax.erf lowering issues).
    a1, a2, a3, a4, a5 = (0.254829592, -0.284496736, 1.421413741,
                          -1.453152027, 1.061405429)
    p = 0.3275911
    ax = jnp.abs(x)
    t = 1.0 / (1.0 + p * ax)
    poly = ((((a5 * t + a4) * t + a3) * t + a2) * t + a1) * t
    y = 1.0 - poly * jnp.exp(-ax * ax)
    return jnp.where(x >= 0, y, -y)


def _gelu(x):
    return 0.5 * x * (1.0 + _erf_poly(x * (1.0 / math.sqrt(2.0))))


# ------------------------ kernel 1: LN + Q / K / V --------------------------- #

def _ln_qkv_kernel(x_ref, g_ref, b_ref, wq_ref, wk_ref, wv_ref,
                   q_ref, k_ref, v_ref, xn_ref):
    # LayerNorm computed once per row tile (j == 0), cached in bf16 scratch.
    @pl.when(pl.program_id(1) == 0)
    def _():
        xn_ref[...] = _layernorm(x_ref[...], g_ref[...],
                                 b_ref[...]).astype(MXU_DTYPE)

    xn = xn_ref[...]
    q_ref[...] = jnp.dot(xn, wq_ref[...],
                         preferred_element_type=jnp.float32).astype(q_ref.dtype)
    k_ref[...] = jnp.dot(xn, wk_ref[...],
                         preferred_element_type=jnp.float32).astype(k_ref.dtype)
    v_ref[...] = jnp.dot(xn, wv_ref[...],
                         preferred_element_type=jnp.float32).astype(v_ref.dtype)


def ln_qkv(x2d, gamma, beta, wq, wk, wv):
    M, D = x2d.shape
    inner = wq.shape[1]
    cfg = _cfg()
    tm = _tile(M, cfg["tm"], 8)
    tc = _tile(inner, cfg["tc"], 128)
    grid = (M // tm, inner // tc)
    out = jax.ShapeDtypeStruct((M, inner), MXU_DTYPE)
    return pl.pallas_call(
        _ln_qkv_kernel,
        out_shape=(out, out, out),
        grid=grid,
        in_specs=[pl.BlockSpec((tm, D), lambda i, j: (i, 0)),
                  pl.BlockSpec((1, D), lambda i, j: (0, 0)),
                  pl.BlockSpec((1, D), lambda i, j: (0, 0)),
                  pl.BlockSpec((D, tc), lambda i, j: (0, j)),
                  pl.BlockSpec((D, tc), lambda i, j: (0, j)),
                  pl.BlockSpec((D, tc), lambda i, j: (0, j))],
        out_specs=[pl.BlockSpec((tm, tc), lambda i, j: (i, j)),
                   pl.BlockSpec((tm, tc), lambda i, j: (i, j)),
                   pl.BlockSpec((tm, tc), lambda i, j: (i, j))],
        scratch_shapes=[pltpu.VMEM((tm, D), MXU_DTYPE)],
        compiler_params=_cparams("parallel", "arbitrary"),
    )(x2d, gamma.reshape(1, D), beta.reshape(1, D), wq, wk, wv)


# --------------- kernel 2: sequence projection of K and V ------------------- #

def _seqproj_kernel(k_ref, v_ref, pk_ref, pv_ref, ko_ref, vo_ref,
                    kacc_ref, vacc_ref):
    n = pl.program_id(2)

    @pl.when(n == 0)
    def _():
        kacc_ref[...] = jnp.zeros_like(kacc_ref)
        vacc_ref[...] = jnp.zeros_like(vacc_ref)

    # (Kp, tns) @ (tns, tc) -> (Kp, tc), canonical MXU orientation.
    kacc_ref[...] += jnp.dot(pk_ref[...], k_ref[0],
                             preferred_element_type=jnp.float32)
    vacc_ref[...] += jnp.dot(pv_ref[...], v_ref[0],
                             preferred_element_type=jnp.float32)

    @pl.when(n == pl.num_programs(2) - 1)
    def _():
        ko_ref[0] = kacc_ref[...].astype(ko_ref.dtype)
        vo_ref[0] = vacc_ref[...].astype(vo_ref.dtype)


def seq_project_kv(k3, v3, proj_kT, proj_vT):
    B, N, inner = k3.shape
    Kp = proj_kT.shape[0]
    cfg = _cfg()
    tns = _tile(N, cfg["tk"], 128)      # lane dim of the projT block
    tc = _tile(inner, cfg["tc"], 128)   # extra parallel axis (helps v7x, B=1)
    grid = (B, inner // tc, N // tns)
    out = jax.ShapeDtypeStruct((B, Kp, inner), MXU_DTYPE)
    return pl.pallas_call(
        _seqproj_kernel,
        out_shape=(out, out),
        grid=grid,
        in_specs=[pl.BlockSpec((1, tns, tc), lambda b, c, n: (b, n, c)),
                  pl.BlockSpec((1, tns, tc), lambda b, c, n: (b, n, c)),
                  pl.BlockSpec((Kp, tns), lambda b, c, n: (0, n)),
                  pl.BlockSpec((Kp, tns), lambda b, c, n: (0, n))],
        out_specs=[pl.BlockSpec((1, Kp, tc), lambda b, c, n: (b, 0, c)),
                   pl.BlockSpec((1, Kp, tc), lambda b, c, n: (b, 0, c))],
        scratch_shapes=[pltpu.VMEM((Kp, tc), jnp.float32),
                        pltpu.VMEM((Kp, tc), jnp.float32)],
        compiler_params=_cparams("parallel", "parallel", "arbitrary"),
    )(k3, v3, proj_kT, proj_vT)


# ------------- kernel 3: attention (all heads) + W_o + residual ------------- #

def _attn_kernel(q_ref, k_ref, v_ref, wo_ref, bo_ref, xres_ref, o_ref,
                 *, heads, dim_head):
    tq = q_ref.shape[1]
    D = o_ref.shape[2]
    acc = jnp.broadcast_to(bo_ref[...], (tq, D)).astype(jnp.float32)
    for h in range(heads):                      # static unroll, heads is small
        sl = slice(h * dim_head, (h + 1) * dim_head)
        qh = q_ref[0, :, sl]                    # (tq, dh) bf16 (scale folded into wq)
        kh = k_ref[0, :, sl]                    # (Kp, dh) bf16
        vh = v_ref[0, :, sl]                    # (Kp, dh) bf16
        dots = lax.dot_general(qh, kh, (((1,), (1,)), ((), ())),
                               preferred_element_type=jnp.float32)   # (tq, Kp)
        dots = dots - jnp.max(dots, axis=-1, keepdims=True)
        p = jnp.exp(dots)
        p = p * pl.reciprocal(jnp.sum(p, axis=-1, keepdims=True), approx=True)
        attn_h = jnp.dot(p.astype(MXU_DTYPE), vh,
                         preferred_element_type=jnp.float32)          # (tq, dh)
        acc = acc + jnp.dot(attn_h.astype(MXU_DTYPE), wo_ref[h],
                            preferred_element_type=jnp.float32)       # (tq, D)
    o_ref[0] = (xres_ref[0] + acc).astype(o_ref.dtype)


def attention_out(q3, kp, vp, wo3, bo, xres):
    B, N, inner = q3.shape
    heads, dim_head, D = wo3.shape
    Kp = kp.shape[1]
    cfg = _cfg()
    tq = _tile(N, cfg["tq"], 8)
    grid = (B, N // tq)
    return pl.pallas_call(
        functools.partial(_attn_kernel, heads=heads, dim_head=dim_head),
        out_shape=jax.ShapeDtypeStruct((B, N, D), xres.dtype),
        grid=grid,
        in_specs=[pl.BlockSpec((1, tq, inner), lambda b, i: (b, i, 0)),
                  pl.BlockSpec((1, Kp, inner), lambda b, i: (b, 0, 0)),
                  pl.BlockSpec((1, Kp, inner), lambda b, i: (b, 0, 0)),
                  pl.BlockSpec((heads, dim_head, D), lambda b, i: (0, 0, 0)),
                  pl.BlockSpec((1, D), lambda b, i: (0, 0)),
                  pl.BlockSpec((1, tq, D), lambda b, i: (b, i, 0))],
        out_specs=pl.BlockSpec((1, tq, D), lambda b, i: (b, i, 0)),
        compiler_params=_cparams("parallel", "parallel"),
    )(q3, kp, vp, wo3, bo.reshape(1, D), xres)


# ---- kernel 4: fused FFN (LN + W1 + b1 + GELU + W2 + b2 + residual) --------- #

def _ffn_kernel(x_ref, g_ref, b_ref, w1_ref, b1_ref, w2_ref, b2_ref,
                o_ref, xn_ref, acc_ref):
    j = pl.program_id(1)

    @pl.when(j == 0)
    def _():
        xn_ref[...] = _layernorm(x_ref[...], g_ref[...],
                                 b_ref[...]).astype(MXU_DTYPE)
        acc_ref[...] = jnp.zeros_like(acc_ref)

    h = jnp.dot(xn_ref[...], w1_ref[...],
                preferred_element_type=jnp.float32) + b1_ref[...]
    h = _gelu(h).astype(MXU_DTYPE)
    acc_ref[...] += jnp.dot(h, w2_ref[...], preferred_element_type=jnp.float32)

    @pl.when(j == pl.num_programs(1) - 1)
    def _():
        o_ref[...] = (acc_ref[...] + b2_ref[...] + x_ref[...]).astype(o_ref.dtype)


def ffn_block(x2d, gamma, beta, w1, b1, w2, b2):
    M, D = x2d.shape
    H = w1.shape[1]
    cfg = _cfg()
    tm = _tile(M, cfg["tm"], 8)
    th = _tile(H, cfg["tk"], 128)
    grid = (M // tm, H // th)
    return pl.pallas_call(
        _ffn_kernel,
        out_shape=jax.ShapeDtypeStruct((M, D), x2d.dtype),
        grid=grid,
        in_specs=[pl.BlockSpec((tm, D), lambda i, j: (i, 0)),
                  pl.BlockSpec((1, D), lambda i, j: (0, 0)),
                  pl.BlockSpec((1, D), lambda i, j: (0, 0)),
                  pl.BlockSpec((D, th), lambda i, j: (0, j)),
                  pl.BlockSpec((1, th), lambda i, j: (0, j)),
                  pl.BlockSpec((th, D), lambda i, j: (j, 0)),
                  pl.BlockSpec((1, D), lambda i, j: (0, 0))],
        out_specs=pl.BlockSpec((tm, D), lambda i, j: (i, 0)),
        scratch_shapes=[pltpu.VMEM((tm, D), MXU_DTYPE),
                        pltpu.VMEM((tm, D), jnp.float32)],
        compiler_params=_cparams("parallel", "arbitrary"),
    )(x2d, gamma.reshape(1, D), beta.reshape(1, D),
      w1, b1.reshape(1, H), w2, b2.reshape(1, D))


# ------------------------------- model glue --------------------------------- #

def init_params(key, dim, seq_len, depth, heads, k):
    dim_head = dim // heads
    inner = dim_head * heads
    hidden = dim * 4
    scale = dim_head ** -0.5

    def u(kk, shape, fan_in):
        bound = 1.0 / math.sqrt(fan_in)
        return jax.random.uniform(kk, shape, jnp.float32, -bound, bound)

    layers = []
    for _ in range(depth):
        key, *ks = jax.random.split(key, 12)
        wq = u(ks[0], (dim, inner), dim)
        wk = u(ks[1], (dim, inner), dim)
        wv = u(ks[2], (dim, inner), dim)
        proj_k = u(ks[3], (seq_len, k), k)     # lucidrains init_: U(-1/sqrt(k), 1/sqrt(k))
        proj_v = u(ks[4], (seq_len, k), k)
        wo = u(ks[5], (inner, dim), inner)
        layers.append(dict(
            ln1_g=jnp.ones((dim,), jnp.float32),
            ln1_b=jnp.zeros((dim,), jnp.float32),
            # Weights pre-cast to bf16 once (MXU operand dtype); the softmax
            # 1/sqrt(dim_head) scale is folded into wq.
            wq=(wq * scale).astype(MXU_DTYPE),
            wk=wk.astype(MXU_DTYPE),
            wv=wv.astype(MXU_DTYPE),
            proj_kT=proj_k.T.astype(MXU_DTYPE),           # (k, seq_len)
            proj_vT=proj_v.T.astype(MXU_DTYPE),
            wo3=wo.reshape(heads, dim_head, dim).astype(MXU_DTYPE),
            bo=u(ks[6], (dim,), inner),
            ln2_g=jnp.ones((dim,), jnp.float32),
            ln2_b=jnp.zeros((dim,), jnp.float32),
            w1=u(ks[7], (dim, hidden), dim).astype(MXU_DTYPE),
            b1=u(ks[8], (hidden,), dim),
            w2=u(ks[9], (hidden, dim), hidden).astype(MXU_DTYPE),
            b2=u(ks[10], (dim,), hidden),
        ))
    return layers


def linformer_forward(x, layers):
    B, N, D = x.shape
    M = B * N

    for p in layers:
        inner = p["wq"].shape[1]
        # ---- attention block: x = x + Attn(LN(x)) (LN/QKV/proj/Wo fused) ----
        x2d = x.reshape(M, D)
        q2d, k2d, v2d = ln_qkv(x2d, p["ln1_g"], p["ln1_b"],
                               p["wq"], p["wk"], p["wv"])
        q3 = q2d.reshape(B, N, inner)
        k3 = k2d.reshape(B, N, inner)
        v3 = v2d.reshape(B, N, inner)
        kp, vp = seq_project_kv(k3, v3, p["proj_kT"], p["proj_vT"])  # (B, k, inner)
        x = attention_out(q3, kp, vp, p["wo3"], p["bo"], x)

        # ---- feed-forward block: x = x + FFN(LN(x)), fully fused in-kernel ----
        x2d = x.reshape(M, D)
        x = ffn_block(x2d, p["ln2_g"], p["ln2_b"], p["w1"], p["b1"],
                      p["w2"], p["b2"]).reshape(B, N, D)
        # dropout is p=0.0 in this config -> identity
    return x


if __name__ == "__main__":
    dim, seq_len, depth, heads, k = 32, 16, 2, 4, 8
    batch = 2

    key = jax.random.PRNGKey(0)
    key, xkey = jax.random.split(key)
    x = jax.random.normal(xkey, (batch, seq_len, dim), jnp.float32)
    layers = init_params(key, dim, seq_len, depth, heads, k)

    out = linformer_forward(x, layers)
    jax.block_until_ready(out)
    assert out.shape == (batch, seq_len, dim) and out.dtype == jnp.float32
    print("KERNEL_OK")
</pallas_src>

<mosaic_0001>
module attributes {stable_mosaic.version = 11 : i64} {
  func.func @_ln_qkv_kernel(%arg0: i32, %arg1: i32, %arg2: memref<32x32xf32, #tpu.memory_space<vmem>>, %arg3: memref<1x32xf32, #tpu.memory_space<vmem>>, %arg4: memref<1x32xf32, #tpu.memory_space<vmem>>, %arg5: memref<32x32xbf16, #tpu.memory_space<vmem>>, %arg6: memref<32x32xbf16, #tpu.memory_space<vmem>>, %arg7: memref<32x32xbf16, #tpu.memory_space<vmem>>, %arg8: memref<32x32xbf16, #tpu.memory_space<vmem>>, %arg9: memref<32x32xbf16, #tpu.memory_space<vmem>>, %arg10: memref<32x32xbf16, #tpu.memory_space<vmem>>, %arg11: memref<32x32xbf16, #tpu.memory_space<vmem>>) attributes {dimension_semantics = [#tpu.dimension_semantics<parallel>, #tpu.dimension_semantics<arbitrary>], iteration_bounds = array<i64: 1, 1>, scalar_prefetch = 0 : i64, scratch_operands = 1 : i64, tpu.core_type = #tpu.core_type<tc>, window_params = [{transform_indices = @transform_0, window_bounds = array<i64: 32, 32>}, {pipeline_mode = #tpu.pipeline_mode<synchronous>, transform_indices = @transform_1, window_bounds = array<i64: 1, 32>}, {pipeline_mode = #tpu.pipeline_mode<synchronous>, transform_indices = @transform_2, window_bounds = array<i64: 1, 32>}, {transform_indices = @transform_3, window_bounds = array<i64: 32, 32>}, {transform_indices = @transform_4, window_bounds = array<i64: 32, 32>}, {transform_indices = @transform_5, window_bounds = array<i64: 32, 32>}, {transform_indices = @transform_6, window_bounds = array<i64: 32, 32>}, {transform_indices = @transform_7, window_bounds = array<i64: 32, 32>}, {transform_indices = @transform_8, window_bounds = array<i64: 32, 32>}]} {
    %c0_i32 = arith.constant 0 : i32
    %0 = arith.cmpi eq, %arg1, %c0_i32 : i32
    %1 = arith.extui %0 : i1 to i32
    %c0_i32_0 = arith.constant 0 : i32
    %2 = arith.cmpi ne, %1, %c0_i32_0 : i32
    scf.if %2 {
      %c0_16 = arith.constant 0 : index
      %c0_17 = arith.constant 0 : index
      %16 = vector.load %arg2[%c0_16, %c0_17] : memref<32x32xf32, #tpu.memory_space<vmem>>, vector<32x32xf32>
      %c0_18 = arith.constant 0 : index
      %c0_19 = arith.constant 0 : index
      %17 = vector.load %arg3[%c0_18, %c0_19] : memref<1x32xf32, #tpu.memory_space<vmem>>, vector<1x32xf32>
      %c0_20 = arith.constant 0 : index
      %c0_21 = arith.constant 0 : index
      %18 = vector.load %arg4[%c0_20, %c0_21] : memref<1x32xf32, #tpu.memory_space<vmem>>, vector<1x32xf32>
      %cst_22 = arith.constant dense<0.000000e+00> : vector<32xf32>
      %19 = vector.multi_reduction <add>, %16, %cst_22 [1] : vector<32x32xf32> to vector<32xf32>
      %20 = vector.shape_cast %19 : vector<32xf32> to vector<32x1xf32>
      %cst_23 = arith.constant 3.200000e+01 : f32
      %21 = vector.broadcast %cst_23 : f32 to vector<32x1xf32>
      %22 = arith.divf %20, %21 : vector<32x1xf32>
      %23 = vector.broadcast %22 : vector<32x1xf32> to vector<32x32xf32>
      %24 = arith.subf %16, %23 : vector<32x32xf32>
      %25 = arith.mulf %24, %24 : vector<32x32xf32>
      %cst_24 = arith.constant dense<0.000000e+00> : vector<32xf32>
      %26 = vector.multi_reduction <add>, %25, %cst_24 [1] : vector<32x32xf32> to vector<32xf32>
      %27 = vector.shape_cast %26 : vector<32xf32> to vector<32x1xf32>
      %cst_25 = arith.constant 3.200000e+01 : f32
      %28 = vector.broadcast %cst_25 : f32 to vector<32x1xf32>
      %29 = arith.divf %27, %28 : vector<32x1xf32>
      %30 = vector.broadcast %22 : vector<32x1xf32> to vector<32x32xf32>
      %31 = arith.subf %16, %30 : vector<32x32xf32>
      %cst_26 = arith.constant 9.99999974E-6 : f32
      %32 = vector.broadcast %cst_26 : f32 to vector<32x1xf32>
      %33 = arith.addf %29, %32 : vector<32x1xf32>
      %34 = math.rsqrt %33 : vector<32x1xf32>
      %35 = vector.broadcast %34 : vector<32x1xf32> to vector<32x32xf32>
      %36 = arith.mulf %31, %35 : vector<32x32xf32>
      %37 = vector.broadcast %17 : vector<1x32xf32> to vector<32x32xf32>
      %38 = arith.mulf %36, %37 : vector<32x32xf32>
      %39 = vector.broadcast %18 : vector<1x32xf32> to vector<32x32xf32>
      %40 = arith.addf %38, %39 : vector<32x32xf32>
      %41 = arith.truncf %40 : vector<32x32xf32> to vector<32x32xbf16>
      %c0_27 = arith.constant 0 : index
      %c0_28 = arith.constant 0 : index
      %42 = vector.load %arg11[%c0_27, %c0_28] : memref<32x32xbf16, #tpu.memory_space<vmem>>, vector<32x32xbf16>
      tpu.vector_store %arg11[%c0_27, %c0_28], %41 {strides = array<i32>} : memref<32x32xbf16, #tpu.memory_space<vmem>>, vector<32x32xbf16>,
    } else {
    }
    %c0 = arith.constant 0 : index
    %c0_1 = arith.constant 0 : index
    %3 = vector.load %arg11[%c0, %c0_1] : memref<32x32xbf16, #tpu.memory_space<vmem>>, vector<32x32xbf16>
    %c0_2 = arith.constant 0 : index
    %c0_3 = arith.constant 0 : index
    %4 = vector.load %arg5[%c0_2, %c0_3] : memref<32x32xbf16, #tpu.memory_space<vmem>>, vector<32x32xbf16>
    %cst = arith.constant dense<0.000000e+00> : vector<32x32xf32>
    %5 = tpu.matmul %3, %4, %cst {dimension_numbers = #tpu.dot_dimension_numbers<[1], [0], [0], [1], [0, 0, 1, 1], [], []>} : vector<32x32xbf16>, vector<32x32xbf16>, vector<32x32xf32> -> vector<32x32xf32>
    %6 = arith.truncf %5 : vector<32x32xf32> to vector<32x32xbf16>
    %c0_4 = arith.constant 0 : index
    %c0_5 = arith.constant 0 : index
    %7 = vector.load %arg8[%c0_4, %c0_5] : memref<32x32xbf16, #tpu.memory_space<vmem>>, vector<32x32xbf16>
    tpu.vector_store %arg8[%c0_4, %c0_5], %6 {strides = array<i32>} : memref<32x32xbf16, #tpu.memory_space<vmem>>, vector<32x32xbf16>,
    %c0_6 = arith.constant 0 : index
    %c0_7 = arith.constant 0 : index
    %8 = vector.load %arg6[%c0_6, %c0_7] : memref<32x32xbf16, #tpu.memory_space<vmem>>, vector<32x32xbf16>
    %cst_8 = arith.constant dense<0.000000e+00> : vector<32x32xf32>
    %9 = tpu.matmul %3, %8, %cst_8 {dimension_numbers = #tpu.dot_dimension_numbers<[1], [0], [0], [1], [0, 0, 1, 1], [], []>} : vector<32x32xbf16>, vector<32x32xbf16>, vector<32x32xf32> -> vector<32x32xf32>
    %10 = arith.truncf %9 : vector<32x32xf32> to vector<32x32xbf16>
    %c0_9 = arith.constant 0 : index
    %c0_10 = arith.constant 0 : index
    %11 = vector.load %arg9[%c0_9, %c0_10] : memref<32x32xbf16, #tpu.memory_space<vmem>>, vector<32x32xbf16>
    tpu.vector_store %arg9[%c0_9, %c0_10], %10 {strides = array<i32>} : memref<32x32xbf16, #tpu.memory_space<vmem>>, vector<32x32xbf16>,
    %c0_11 = arith.constant 0 : index
    %c0_12 = arith.constant 0 : index
    %12 = vector.load %arg7[%c0_11, %c0_12] : memref<32x32xbf16, #tpu.memory_space<vmem>>, vector<32x32xbf16>
    %cst_13 = arith.constant dense<0.000000e+00> : vector<32x32xf32>
    %13 = tpu.matmul %3, %12, %cst_13 {dimension_numbers = #tpu.dot_dimension_numbers<[1], [0], [0], [1], [0, 0, 1, 1], [], []>} : vector<32x32xbf16>, vector<32x32xbf16>, vector<32x32xf32> -> vector<32x32xf32>
    %14 = arith.truncf %13 : vector<32x32xf32> to vector<32x32xbf16>
    %c0_14 = arith.constant 0 : index
    %c0_15 = arith.constant 0 : index
    %15 = vector.load %arg10[%c0_14, %c0_15] : memref<32x32xbf16, #tpu.memory_space<vmem>>, vector<32x32xbf16>
    tpu.vector_store %arg10[%c0_14, %c0_15], %14 {strides = array<i32>} : memref<32x32xbf16, #tpu.memory_space<vmem>>, vector<32x32xbf16>,
    return
  }
  func.func @transform_0(%arg0: i32, %arg1: i32) -> (i32, i32) {
    %c0_i32 = arith.constant 0 : i32
    %c0_i32_0 = arith.constant 0 : i32
    return %arg0, %c0_i32 : i32, i32
  }
  func.func @transform_1(%arg0: i32, %arg1: i32) -> (i32, i32) {
    %c0_i32 = arith.constant 0 : i32
    %c0_i32_0 = arith.constant 0 : i32
    %c0_i32_1 = arith.constant 0 : i32
    return %c0_i32, %c0_i32_0 : i32, i32
  }
  func.func @transform_2(%arg0: i32, %arg1: i32) -> (i32, i32) {
    %c0_i32 = arith.constant 0 : i32
    %c0_i32_0 = arith.constant 0 : i32
    %c0_i32_1 = arith.constant 0 : i32
    return %c0_i32, %c0_i32_0 : i32, i32
  }
  func.func @transform_3(%arg0: i32, %arg1: i32) -> (i32, i32) {
    %c0_i32 = arith.constant 0 : i32
    %c0_i32_0 = arith.constant 0 : i32
    return %c0_i32, %arg1 : i32, i32
  }
  func.func @transform_4(%arg0: i32, %arg1: i32) -> (i32, i32) {
    %c0_i32 = arith.constant 0 : i32
    %c0_i32_0 = arith.constant 0 : i32
    return %c0_i32, %arg1 : i32, i32
  }
  func.func @transform_5(%arg0: i32, %arg1: i32) -> (i32, i32) {
    %c0_i32 = arith.constant 0 : i32
    %c0_i32_0 = arith.constant 0 : i32
    return %c0_i32, %arg1 : i32, i32
  }
  func.func @transform_6(%arg0: i32, %arg1: i32) -> (i32, i32) {
    %c0_i32 = arith.constant 0 : i32
    return %arg0, %arg1 : i32, i32
  }
  func.func @transform_7(%arg0: i32, %arg1: i32) -> (i32, i32) {
    %c0_i32 = arith.constant 0 : i32
    return %arg0, %arg1 : i32, i32
  }
  func.func @transform_8(%arg0: i32, %arg1: i32) -> (i32, i32) {
    %c0_i32 = arith.constant 0 : i32
    return %arg0, %arg1 : i32, i32
  }
}

</mosaic_0001>

<llo_original>
// kernel: tpu_custom_call.1
$region0: #{tpu_custom_call.1}
  #allocation0 [shape = 'u32[]', space=smem, size = 0x4, offset = 0x4, fixed_abs, tag = 'smem constant byte address 0x4 - core index']
  #allocation1 [shape = 'u32[72,128]{1,0:T(1,128)}', space=vmem, size = 0x9000, scoped, tag = 'internal scratch']
  #allocation2 [shape = 'bf16[32,32]{1,0:T(8,128)(2,1)}', space=vmem, size = 0x2000, scoped, tag = 'scratch operand']
  %s0 = inlined_call_operand.hbm [shape: f32[32,32], index: 0, kind: input, shape index: {}]
  %s1 = inlined_call_operand.hbm [shape: f32[1,32], index: 1, kind: input, shape index: {}]
  %s2 = inlined_call_operand.vmem [shape: f32[1,32], index: 2, kind: input, shape index: {}]
  %s3 = inlined_call_operand.hbm [shape: bf16[32,32], index: 3, kind: input, shape index: {}]
  %s4 = inlined_call_operand.hbm [shape: bf16[32,32], index: 4, kind: input, shape index: {}]
  %s5 = inlined_call_operand.hbm [shape: bf16[32,32], index: 5, kind: input, shape index: {}]
  %s6 = inlined_call_operand.hbm [shape: bf16[32,32], index: 6, kind: output, shape index: {0}]
  %s7 = inlined_call_operand.hbm [shape: bf16[32,32], index: 7, kind: output, shape index: {1}]
  %s8 = inlined_call_operand.hbm [shape: bf16[32,32], index: 8, kind: output, shape index: {2}]
  %9 = xla_tuple %s6, %s7, %s8
  %s10 = sld [smem:[#allocation0]]
  $region74: #{tpu_custom_call.1} parent=0
    _
  %s12 = ssub.s32 1, %s10
  %s13 = scalar_select 0, %s12, %s10
  $region1: #{tpu_custom_call.1} parent=0
    #allocation3 [shape = 'u8[16384]{0}', space=vmem, size = 0x4000, scoped, tag = 'input window, operand 0, single buffered']
    #allocation4 [shape = 's32[1]{0}', space=sflag, size = 0x4, scoped, tag = 'scoped memory for tpu_custom_call.1']
    #allocation5 [shape = 's32[1]{0}', space=sflag, size = 0x4, scoped, tag = 'scoped memory for tpu_custom_call.1']
    #allocation6 [shape = 'u8[512]{0}', space=vmem, size = 0x400, scoped, tag = 'input window, operand 1, single buffered']
    #allocation7 [shape = 's32[1]{0}', space=sflag, size = 0x4, scoped, tag = 'scoped memory for tpu_custom_call.1']
    #allocation8 [shape = 'u8[8192]{0}', space=vmem, size = 0x2000, scoped, tag = 'input window, operand 3, single buffered']
    #allocation9 [shape = 'u8[8192]{0}', space=vmem, size = 0x2000, scoped, tag = 'input window, operand 4, single buffered']
    #allocation10 [shape = 's32[1]{0}', space=sflag, size = 0x4, scoped, tag = 'scoped memory for tpu_custom_call.1']
    #allocation11 [shape = 'u8[8192]{0}', space=vmem, size = 0x2000, scoped, tag = 'input window, operand 5, single buffered']
    #allocation12 [shape = 'u8[8192]{0}', space=vmem, size = 0x2000, scoped, tag = 'output window, operand 0, single buffered']
    #allocation13 [shape = 'u8[8192]{0}', space=vmem, size = 0x2000, scoped, tag = 'output window, operand 1, single buffered']
    #allocation14 [shape = 's32[1]{0}', space=sflag, size = 0x4, scoped, tag = 'scoped memory for tpu_custom_call.1']
    #allocation15 [shape = 'u8[8192]{0}', space=vmem, size = 0x2000, scoped, tag = 'output window, operand 2, single buffered']
    %14 = vsyncpa [#allocation4], 0
    %15 = vsyncpa [#allocation7], 0
    %16 = vsyncpa [#allocation10], 0
    %17 = vsyncpa [#allocation5], 0
    %18 = vsyncpa [#allocation14], 0
    // Predicated region
    $region2: #{tpu_custom_call.1} parent=1 // pred_check
      _
    $region3: #{tpu_custom_call.1} parent=1 // pred_check_branch
      %20 = sbr.rel (0) target = $region5
    $region4: #{tpu_custom_call.1} parent=1 // pred_region
      %22 = vsyncadd [#allocation4], 0
      %s23 = sshll.u32 %s0, 4
      %s24 = int_to_ptr.hbm [resolvable:$true] %s23
      %s25 = sshll.u32 [#allocation3], 4
      %s26 = int_to_ptr.vmem [resolvable:$true] %s25
      %31 = dma.hbm_to_vmem [thread:$0]  %s24, 512, %s26, [#allocation4], 128, 128, 8
    $region5: #{tpu_custom_call.1} parent=1 // pred_fallthru
      _
    // Predicated region
    $region6: #{tpu_custom_call.1} parent=1 // pred_check
      _
    $region7: #{tpu_custom_call.1} parent=1 // pred_check_branch
      %33 = sbr.rel (0) target = $region9
    $region8: #{tpu_custom_call.1} parent=1 // pred_region
      %35 = vsyncadd [#allocation7], 0
      %s37 = sshll.u32 %s1, 4
      %s38 = int_to_ptr.hbm [resolvable:$true] %s37
      %s39 = sshll.u32 [#allocation6], 4
      %s40 = int_to_ptr.vmem [resolvable:$true] %s39
      %42 = dma.hbm_to_vmem [thread:$0]  %s38, 16, %s40, [#allocation7]
    $region9: #{tpu_custom_call.1} parent=1 // pred_fallthru
      _
    // Predicated region
    $region10: #{tpu_custom_call.1} parent=1 // pred_check
      _
    $region11: #{tpu_custom_call.1} parent=1 // pred_check_branch
      %44 = sbr.rel (0) target = $region13
    $region12: #{tpu_custom_call.1} parent=1 // pred_region
      _
    $region13: #{tpu_custom_call.1} parent=1 // pred_fallthru
      _
    // Predicated region
    $region14: #{tpu_custom_call.1} parent=1 // pred_check
      _
    $region15: #{tpu_custom_call.1} parent=1 // pred_check_branch
      %46 = sbr.rel (0) target = $region17
    $region16: #{tpu_custom_call.1} parent=1 // pred_region
      %48 = vsyncadd [#allocation7], 0
      %s49 = sshll.u32 %s3, 4
      %s50 = int_to_ptr.hbm [resolvable:$true] %s49
      %s51 = sshll.u32 [#allocation8], 4
      %s52 = int_to_ptr.vmem [resolvable:$true] %s51
      %57 = dma.hbm_to_vmem [thread:$0]  %s50, 256, %s52, [#allocation7], 64, 64, 4
    $region17: #{tpu_custom_call.1} parent=1 // pred_fallthru
      _
    // Predicated region
    $region18: #{tpu_custom_call.1} parent=1 // pred_check
      _
    $region19: #{tpu_custom_call.1} parent=1 // pred_check_branch
      %59 = sbr.rel (0) target = $region21
    $region20: #{tpu_custom_call.1} parent=1 // pred_region
      %61 = vsyncadd [#allocation10], 0
      %s62 = sshll.u32 %s4, 4
      %s63 = int_to_ptr.hbm [resolvable:$true] %s62
      %s64 = sshll.u32 [#allocation9], 4
      %s65 = int_to_ptr.vmem [resolvable:$true] %s64
      %70 = dma.hbm_to_vmem [thread:$0]  %s63, 256, %s65, [#allocation10], 64, 64, 4
    $region21: #{tpu_custom_call.1} parent=1 // pred_fallthru
      _
    // Predicated region
    $region22: #{tpu_custom_call.1} parent=1 // pred_check
      _
    $region23: #{tpu_custom_call.1} parent=1 // pred_check_branch
      %72 = sbr.rel (0) target = $region25
    $region24: #{tpu_custom_call.1} parent=1 // pred_region
      %74 = vsyncadd [#allocation10], 0
      %s75 = sshll.u32 %s5, 4
      %s76 = int_to_ptr.hbm [resolvable:$true] %s75
      %s77 = sshll.u32 [#allocation11], 4
      %s78 = int_to_ptr.vmem [resolvable:$true] %s77
      %83 = dma.hbm_to_vmem [thread:$0]  %s76, 256, %s78, [#allocation10], 64, 64, 4
    $region25: #{tpu_custom_call.1} parent=1 // pred_fallthru
      _
    // Predicated region
    $region26: #{tpu_custom_call.1} parent=1 // pred_check
      _
    $region27: #{tpu_custom_call.1} parent=1 // pred_check_branch
      %85 = sbr.rel (0) target = $region29
    $region28: #{tpu_custom_call.1} parent=1 // pred_region
      %87 = dma.done [#allocation4], 512
    $region29: #{tpu_custom_call.1} parent=1 // pred_fallthru
      _
    // Predicated region
    $region30: #{tpu_custom_call.1} parent=1 // pred_check
      _
    $region31: #{tpu_custom_call.1} parent=1 // pred_check_branch
      %89 = sbr.rel (0) target = $region33
    $region32: #{tpu_custom_call.1} parent=1 // pred_region
      %91 = dma.done [#allocation7], 16
    $region33: #{tpu_custom_call.1} parent=1 // pred_fallthru
      _
    // Predicated region
    $region34: #{tpu_custom_call.1} parent=1 // pred_check
      _
    $region35: #{tpu_custom_call.1} parent=1 // pred_check_branch
      %93 = sbr.rel (0) target = $region37
    $region36: #{tpu_custom_call.1} parent=1 // pred_region
      %95 = dma.done [#allocation7], 256
    $region37: #{tpu_custom_call.1} parent=1 // pred_fallthru
      _
    // Predicated region
    $region38: #{tpu_custom_call.1} parent=1 // pred_check
      _
    $region39: #{tpu_custom_call.1} parent=1 // pred_check_branch
      %97 = sbr.rel (0) target = $region41
    $region40: #{tpu_custom_call.1} parent=1 // pred_region
      %99 = dma.done [#allocation10], 256
    $region41: #{tpu_custom_call.1} parent=1 // pred_fallthru
      _
    // Predicated region
    $region42: #{tpu_custom_call.1} parent=1 // pred_check
      _
    $region43: #{tpu_custom_call.1} parent=1 // pred_check_branch
      %101 = sbr.rel (0) target = $region45
    $region44: #{tpu_custom_call.1} parent=1 // pred_region
      %103 = dma.done [#allocation10], 256
    $region45: #{tpu_custom_call.1} parent=1 // pred_fallthru
      _
    %p105 = scmp.eq.s32.totalorder 0, 0
    // Predicated region
    $region46: #{tpu_custom_call.1} parent=1 // pred_check
      %p106 = pneg %p105
    $region47: #{tpu_custom_call.1} parent=1 // pred_check_branch
      %108 = sbr.rel (%p106) target = $region49
    $region48: #{tpu_custom_call.1} parent=1 // pred_region
      %v109 = vld [vmem:[#allocation3] sm:$0xff]
      %v110 = vld [vmem:[#allocation3 + $0x8] sm:$0xff]
      %v111 = vld [vmem:[#allocation3 + $0x10] sm:$0xff]
      %v112 = vld [vmem:[#allocation3 + $0x18] sm:$0xff]
      %v113 = vld [vmem:[#allocation6] sm:$0x1]
      %v114 = vld [vmem:[%s2] sm:$0x1]
      %vm115 = vcmask 261120
      %v116 = vsel %vm115, %v109, 0.0
      %117 = vadd.xlane.f32.xlu0 %v116
      %v118 = vpop.xlane.xlu0 %117
      %v119 = vsel %vm115, %v110, 0.0
      %120 = vadd.xlane.f32.xlu0 %v119
      %v121 = vpop.xlane.xlu0 %120
      %v122 = vsel %vm115, %v111, 0.0
      %123 = vadd.xlane.f32.xlu0 %v122
      %v124 = vpop.xlane.xlu0 %123
      %v125 = vsel %vm115, %v112, 0.0
      %126 = vadd.xlane.f32.xlu0 %v125
      %v127 = vpop.xlane.xlu0 %126
      %v128 = vrcp.pop 32.0
      %v129 = vmul.f32 32.0, %v128
      %v130 = vsub.f32 1.0, %v129
      %v131 = vmul.f32 %v128, %v130
      %v132 = vadd.f32 %v128, %v131
      %vm133 = vweird.f32 %v128
      %v134 = vsel %vm133, %v128, %v132
      %v135 = vmul.f32 %v118, %v134
      %v136 = vmul.f32 %v121, %v134
      %v137 = vmul.f32 %v124, %v134
      %v138 = vmul.f32 %v127, %v134
      %v139 = vsub.f32 %v109, %v135
      %v140 = vsub.f32 %v110, %v136
      %v141 = vsub.f32 %v111, %v137
      %v142 = vsub.f32 %v112, %v138
      %v143 = vmul.f32 %v139, %v139
      %v144 = vmul.f32 %v140, %v140
      %v145 = vmul.f32 %v141, %v141
      %v146 = vmul.f32 %v142, %v142
      %v147 = vsel %vm115, %v143, 0.0
      %148 = vadd.xlane.f32.xlu0 %v147
      %v149 = vpop.xlane.xlu0 %148
      %v150 = vsel %vm115, %v144, 0.0
      %151 = vadd.xlane.f32.xlu0 %v150
      %v152 = vpop.xlane.xlu0 %151
      %v153 = vsel %vm115, %v145, 0.0
      %154 = vadd.xlane.f32.xlu0 %v153
      %v155 = vpop.xlane.xlu0 %154
      %v156 = vsel %vm115, %v146, 0.0
      %157 = vadd.xlane.f32.xlu0 %v156
      %v158 = vpop.xlane.xlu0 %157
      %v159 = vmul.f32 %v149, %v134
      %v160 = vmul.f32 %v152, %v134
      %v161 = vmul.f32 %v155, %v134
      %v162 = vmul.f32 %v158, %v134
      %v163 = vadd.f32 %v159, 1e-05
      %v164 = vadd.f32 %v160, 1e-05
      %v165 = vadd.f32 %v161, 1e-05
      %v166 = vadd.f32 %v162, 1e-05
      %v167 = vrsqrt.pop %v163
      %v168 = vmul.f32 %v167, %v163
      %v169 = vmul.f32 %v168, %v167
      %v170 = vmul.f32 0.5, %v169
      %v171 = vsub.f32 1.5, %v170
      %v172 = vmul.f32 %v167, %v171
      %vm173 = vweird.f32 %v163
      %vm174 = vweird.f32 %v167
      %vm175 = vmor %vm173, %vm174
      %v176 = vsel %vm175, %v167, %v172
      %v177 = vrsqrt.pop %v164
      %v178 = vmul.f32 %v177, %v164
      %v179 = vmul.f32 %v178, %v177
      %v180 = vmul.f32 0.5, %v179
      %v181 = vsub.f32 1.5, %v180
      %v182 = vmul.f32 %v177, %v181
      %vm183 = vweird.f32 %v164
      %vm184 = vweird.f32 %v177
      %vm185 = vmor %vm183, %vm184
      %v186 = vsel %vm185, %v177, %v182
      %v187 = vrsqrt.pop %v165
      %v188 = vmul.f32 %v187, %v165
      %v189 = vmul.f32 %v188, %v187
      %v190 = vmul.f32 0.5, %v189
      %v191 = vsub.f32 1.5, %v190
      %v192 = vmul.f32 %v187, %v191
      %vm193 = vweird.f32 %v165
      %vm194 = vweird.f32 %v187
      %vm195 = vmor %vm193, %vm194
      %v196 = vsel %vm195, %v187, %v192
      %v197 = vrsqrt.pop %v166
      %v198 = vmul.f32 %v197, %v166
      %v199 = vmul.f32 %v198, %v197
      %v200 = vmul.f32 0.5, %v199
      %v201 = vsub.f32 1.5, %v200
      %v202 = vmul.f32 %v197, %v201
      %vm203 = vweird.f32 %v166
      %vm204 = vweird.f32 %v197
      %vm205 = vmor %vm203, %vm204
      %v206 = vsel %vm205, %v197, %v202
      %v207 = vmul.f32 %v139, %v176
      %v208 = vmul.f32 %v140, %v186
      %v209 = vmul.f32 %v141, %v196
      %v210 = vmul.f32 %v142, %v206
      %v212 = vperm.slane %v113, 0
      %v214 = vmul.f32 %v207, %v212
      %v215 = vmul.f32 %v208, %v212
      %v216 = vmul.f32 %v209, %v212
      %v217 = vmul.f32 %v210, %v212
      %v219 = vperm.slane %v114, 0
      %v221 = vadd.f32 %v214, %v219
      %v222 = vadd.f32 %v215, %v219
      %v223 = vadd.f32 %v216, %v219
      %v224 = vadd.f32 %v217, %v219
      %v225 = vpack.c.bf16 %v221, %v221
      %v226 = vpack.c.bf16 %v222, %v222
      %v227 = vpack.c.bf16 %v223, %v223
      %v228 = vpack.c.bf16 %v224, %v224
      %vm229 = vcmask 257024
      %230 = vst.msk [vmem:[#allocation2] sm:$0xf] %vm229, %v225
      %231 = vst.msk [vmem:[#allocation2 + $0x4] sm:$0xf] %vm229, %v226
      %232 = vst.msk [vmem:[#allocation2 + $0x8] sm:$0xf] %vm229, %v227
      %233 = vst.msk [vmem:[#allocation2 + $0xc] sm:$0xf] %vm229, %v228
    $region49: #{tpu_custom_call.1} parent=1 // pred_fallthru
      _
    %v234 = vld [vmem:[#allocation2] sm:$0xf]
    %v235 = vld [vmem:[#allocation2 + $0x4] sm:$0xf]
    %v236 = vld [vmem:[#allocation2 + $0x8] sm:$0xf]
    %v237 = vld [vmem:[#allocation2 + $0xc] sm:$0xf]
    %v238 = vld [vmem:[#allocation8] sm:$0xf]
    %v239 = vld [vmem:[#allocation8 + $0x4] sm:$0xf]
    %v240 = vld [vmem:[#allocation8 + $0x8] sm:$0xf]
    %v241 = vld [vmem:[#allocation8 + $0xc] sm:$0xf]
    %v246 = vunpack.c.l.b16 %v234
    %v247 = vunpack.c.l.b16 %v235
    %v248 = vunpack.c.l.b16 %v236
    %v249 = vunpack.c.l.b16 %v237
    %v250 = vpack.c.b16 %v247, %v246
    %v251 = vpack.c.b16 %v249, %v248
    %v256 = vunpack.c.l.b16 %v238
    %v257 = vunpack.c.l.b16 %v239
    %v258 = vunpack.c.l.b16 %v240
    %v259 = vunpack.c.l.b16 %v241
    %v260 = vpack.c.b16 %v257, %v256
    %v261 = vpack.c.b16 %v259, %v258
    %vm264 = vcmask 261120
    %v266 = vsel %vm264, %v250, 0
    %v269 = vsel %vm264, %v251, 0
    %271 = vmatpush.bf16.msra.mxu0 0
    %272 = vmatpush.bf16.msra.mxu0 0
    %273 = vmatpush.bf16.msra.mxu0 0
    %274 = vmatpush.bf16.msra.mxu0 0
    %275 = vmatpush.bf16.msra.mxu0 0
    %276 = vmatpush.bf16.msra.mxu0 0
    %277 = vmatpush.bf16.msra.mxu0 %v261
    %278 = vmatpush.bf16.msra.mxu0 %v260
    %279 = vmatmul.bf16.gmra.mxu0 %v266
    %v280 = vpop.f32.mrf.mxu0
    %v281 = vadd.f32 0.0, %v280
    %v282 = vpop.f32.mrf.mxu0
    %v283 = vadd.f32 0.0, %v282
    %284 = vmatmul.bf16.gmra.mxu0 %v269
    %v285 = vpop.f32.mrf.mxu0
    %v286 = vadd.f32 0.0, %v285
    %v287 = vpop.f32.mrf.mxu0
    %v288 = vadd.f32 0.0, %v287
    %289 = vdwg.mxu0
    %v290 = vpack.c.bf16 %v281, %v281
    %v291 = vpack.c.bf16 %v283, %v283
    %v292 = vpack.c.bf16 %v286, %v286
    %v293 = vpack.c.bf16 %v288, %v288
    %vm294 = vcmask 257024
    %295 = vst.msk [vmem:[#allocation12] sm:$0xf] %vm294, %v290
    %296 = vst.msk [vmem:[#allocation12 + $0x4] sm:$0xf] %vm294, %v291
    %297 = vst.msk [vmem:[#allocation12 + $0x8] sm:$0xf] %vm294, %v292
    %298 = vst.msk [vmem:[#allocation12 + $0xc] sm:$0xf] %vm294, %v293
    %v299 = vld [vmem:[#allocation9] sm:$0xf]
    %v300 = vld [vmem:[#allocation9 + $0x4] sm:$0xf]
    %v301 = vld [vmem:[#allocation9 + $0x8] sm:$0xf]
    %v302 = vld [vmem:[#allocation9 + $0xc] sm:$0xf]
    %v307 = vunpack.c.l.b16 %v299
    %v308 = vunpack.c.l.b16 %v300
    %v309 = vunpack.c.l.b16 %v301
    %v310 = vunpack.c.l.b16 %v302
    %v311 = vpack.c.b16 %v308, %v307
    %v312 = vpack.c.b16 %v310, %v309
    %315 = vmatpush.bf16.msra.mxu0 0
    %316 = vmatpush.bf16.msra.mxu0 0
    %317 = vmatpush.bf16.msra.mxu0 0
    %318 = vmatpush.bf16.msra.mxu0 0
    %319 = vmatpush.bf16.msra.mxu0 0
    %320 = vmatpush.bf16.msra.mxu0 0
    %321 = vmatpush.bf16.msra.mxu0 %v312
    %322 = vmatpush.bf16.msra.mxu0 %v311
    %323 = vmatmul.bf16.gmra.mxu0 %v266
    %v324 = vpop.f32.mrf.mxu0
    %v325 = vadd.f32 0.0, %v324
    %v326 = vpop.f32.mrf.mxu0
    %v327 = vadd.f32 0.0, %v326
    %328 = vmatmul.bf16.gmra.mxu0 %v269
    %v329 = vpop.f32.mrf.mxu0
    %v330 = vadd.f32 0.0, %v329
    %v331 = vpop.f32.mrf.mxu0
    %v332 = vadd.f32 0.0, %v331
    %333 = vdwg.mxu0
    %v334 = vpack.c.bf16 %v325, %v325
    %v335 = vpack.c.bf16 %v327, %v327
    %v336 = vpack.c.bf16 %v330, %v330
    %v337 = vpack.c.bf16 %v332, %v332
    %338 = vst.msk [vmem:[#allocation13] sm:$0xf] %vm294, %v334
    %339 = vst.msk [vmem:[#allocation13 + $0x4] sm:$0xf] %vm294, %v335
    %340 = vst.msk [vmem:[#allocation13 + $0x8] sm:$0xf] %vm294, %v336
    %341 = vst.msk [vmem:[#allocation13 + $0xc] sm:$0xf] %vm294, %v337
    %v342 = vld [vmem:[#allocation11] sm:$0xf]
    %v343 = vld [vmem:[#allocation11 + $0x4] sm:$0xf]
    %v344 = vld [vmem:[#allocation11 + $0x8] sm:$0xf]
    %v345 = vld [vmem:[#allocation11 + $0xc] sm:$0xf]
    %v350 = vunpack.c.l.b16 %v342
    %v351 = vunpack.c.l.b16 %v343
    %v352 = vunpack.c.l.b16 %v344
    %v353 = vunpack.c.l.b16 %v345
    %v354 = vpack.c.b16 %v351, %v350
    %v355 = vpack.c.b16 %v353, %v352
    %358 = vmatpush.bf16.msra.mxu0 0
    %359 = vmatpush.bf16.msra.mxu0 0
    %360 = vmatpush.bf16.msra.mxu0 0
    %361 = vmatpush.bf16.msra.mxu0 0
    %362 = vmatpush.bf16.msra.mxu0 0
    %363 = vmatpush.bf16.msra.mxu0 0
    %364 = vmatpush.bf16.msra.mxu0 %v355
    %365 = vmatpush.bf16.msra.mxu0 %v354
    %366 = vmatmul.bf16.gmra.mxu0 %v266
    %v367 = vpop.f32.mrf.mxu0
    %v368 = vadd.f32 0.0, %v367
    %v369 = vpop.f32.mrf.mxu0
    %v370 = vadd.f32 0.0, %v369
    %371 = vmatmul.bf16.gmra.mxu0 %v269
    %v372 = vpop.f32.mrf.mxu0
    %v373 = vadd.f32 0.0, %v372
    %v374 = vpop.f32.mrf.mxu0
    %v375 = vadd.f32 0.0, %v374
    %376 = vdwg.mxu0
    %v377 = vpack.c.bf16 %v368, %v368
    %v378 = vpack.c.bf16 %v370, %v370
    %v379 = vpack.c.bf16 %v373, %v373
    %v380 = vpack.c.bf16 %v375, %v375
    %381 = vst.msk [vmem:[#allocation15] sm:$0xf] %vm294, %v377
    %382 = vst.msk [vmem:[#allocation15 + $0x4] sm:$0xf] %vm294, %v378
    %383 = vst.msk [vmem:[#allocation15 + $0x8] sm:$0xf] %vm294, %v379
    %384 = vst.msk [vmem:[#allocation15 + $0xc] sm:$0xf] %vm294, %v380
    // Predicated region
    $region50: #{tpu_custom_call.1} parent=1 // pred_check
      _
    $region51: #{tpu_custom_call.1} parent=1 // pred_check_branch
      %386 = sbr.rel (0) target = $region53
    $region52: #{tpu_custom_call.1} parent=1 // pred_region
      %388 = vsyncadd [#allocation5], 0
      %s389 = sshll.u32 [#allocation12], 4
      %s390 = int_to_ptr.vmem [resolvable:$true] %s389
      %s391 = sshll.u32 %s6, 4
      %s392 = int_to_ptr.hbm [resolvable:$true] %s391
      %397 = dma.vmem_to_hbm [thread:$0]  %s390, 256, %s392, [#allocation5], 64, 64, 4
    $region53: #{tpu_custom_call.1} parent=1 // pred_fallthru
      _
    // Predicated region
    $region54: #{tpu_custom_call.1} parent=1 // pred_check
      _
    $region55: #{tpu_custom_call.1} parent=1 // pred_check_branch
      %399 = sbr.rel (0) target = $region57
    $region56: #{tpu_custom_call.1} parent=1 // pred_region
      %401 = vsyncadd [#allocation14], 0
      %s402 = sshll.u32 [#allocation13], 4
      %s403 = int_to_ptr.vmem [resolvable:$true] %s402
      %s404 = sshll.u32 %s7, 4
      %s405 = int_to_ptr.hbm [resolvable:$true] %s404
      %410 = dma.vmem_to_hbm [thread:$0]  %s403, 256, %s405, [#allocation14], 64, 64, 4
    $region57: #{tpu_custom_call.1} parent=1 // pred_fallthru
      _
    // Predicated region
    $region58: #{tpu_custom_call.1} parent=1 // pred_check
      _
    $region59: #{tpu_custom_call.1} parent=1 // pred_check_branch
      %412 = sbr.rel (0) target = $region61
    $region60: #{tpu_custom_call.1} parent=1 // pred_region
      %414 = vsyncadd [#allocation14], 0
      %s415 = sshll.u32 [#allocation15], 4
      %s416 = int_to_ptr.vmem [resolvable:$true] %s415
      %s417 = sshll.u32 %s8, 4
      %s418 = int_to_ptr.hbm [resolvable:$true] %s417
      %423 = dma.vmem_to_hbm [thread:$0]  %s416, 256, %s418, [#allocation14], 64, 64, 4
    $region61: #{tpu_custom_call.1} parent=1 // pred_fallthru
      _
    // Predicated region
    $region62: #{tpu_custom_call.1} parent=1 // pred_check
      _
    $region63: #{tpu_custom_call.1} parent=1 // pred_check_branch
      %425 = sbr.rel (0) target = $region65
    $region64: #{tpu_custom_call.1} parent=1 // pred_region
      %427 = dma.done [#allocation5], 256
    $region65: #{tpu_custom_call.1} parent=1 // pred_fallthru
      _
    // Predicated region
    $region66: #{tpu_custom_call.1} parent=1 // pred_check
      _
    $region67: #{tpu_custom_call.1} parent=1 // pred_check_branch
      %429 = sbr.rel (0) target = $region69
    $region68: #{tpu_custom_call.1} parent=1 // pred_region
      %431 = dma.done [#allocation14], 256
    $region69: #{tpu_custom_call.1} parent=1 // pred_fallthru
      _
    // Predicated region
    $region70: #{tpu_custom_call.1} parent=1 // pred_check
      _
    $region71: #{tpu_custom_call.1} parent=1 // pred_check_branch
      %433 = sbr.rel (0) target = $region73
    $region72: #{tpu_custom_call.1} parent=1 // pred_region
      %435 = dma.done [#allocation14], 256
    $region73: #{tpu_custom_call.1} parent=1 // pred_fallthru
      _
    %436 = vsyncpa [#allocation4], 1
    %437 = vsyncpa [#allocation7], 1
    %438 = vsyncpa [#allocation10], 1
    %439 = vsyncpa [#allocation5], 1
    %440 = vsyncpa [#allocation14], 1

</llo_original>
